<compile_context>
chip_gen: v6e
topology: v6e:2x2x1
jax: 0.10.0
libtpu: 0.0.40
codegen_flags: <defaults>
</compile_context>

<pallas_src>
import jax
import jax.numpy as jnp
from jax.experimental import pallas as pl
from jax.experimental.pallas import tpu as pltpu


def dueling_dqn_kernel(
    x_ref,
    w1_ref, b1_ref,     # feature layer 0: state_dim -> 256
    w2_ref, b2_ref,     # feature layer 1: 256 -> 128
    wh1_ref, bh1_ref,   # fused head-1   : 128 -> 128  ([value 64 | adv 64])
    wh2_ref, bh2_ref,   # fused head-2   : 128 -> out_cols (dueling combine folded in)
    out_ref,
):
    # Load f32 input tile and cast to bf16 for the MXU.
    x = x_ref[...].astype(jnp.bfloat16)

    # feature_layer: Linear -> ReLU -> Linear -> ReLU (bf16 MXU, f32 accumulate)
    h1 = jnp.dot(x, w1_ref[...], preferred_element_type=jnp.float32) + b1_ref[...]
    h1 = jnp.maximum(h1, 0.0).astype(jnp.bfloat16)

    feats = jnp.dot(h1, w2_ref[...], preferred_element_type=jnp.float32) + b2_ref[...]
    feats = jnp.maximum(feats, 0.0).astype(jnp.bfloat16)

    # Fused value/advantage head, first layer (128 lanes).
    h = jnp.dot(feats, wh1_ref[...], preferred_element_type=jnp.float32) + bh1_ref[...]
    h = jnp.maximum(h, 0.0).astype(jnp.bfloat16)

    # Fused second layer: dueling combine already folded into wh2/bh2, so the
    # matmul result IS q (columns 0..A-1); padding columns are zero.
    q = jnp.dot(h, wh2_ref[...], preferred_element_type=jnp.float32) + bh2_ref[...]
    out_ref[...] = q.astype(out_ref.dtype)


def _round_up(n, m):
    return ((n + m - 1) // m) * m


def _cdiv(a, b):
    return -(-a // b)


def pack_params(params, action_dim, out_cols):
    """Cast weights to bf16, keep biases in f32, fuse the two head streams and
    fold the dueling combine (value + adv - mean(adv)) into head-2 (in f32)."""
    f32, bf16 = jnp.float32, jnp.bfloat16

    w1 = params["w1"].astype(bf16)
    b1 = params["b1"].astype(f32)
    w2 = params["w2"].astype(bf16)
    b2 = params["b2"].astype(f32)

    # Fused head-1: value/adv first layers side by side -> (128, 128).
    wh1 = jnp.concatenate([params["wv1"], params["wa1"]], axis=1).astype(bf16)
    bh1 = jnp.concatenate([params["bv1"], params["ba1"]], axis=1).astype(f32)

    # Fused head-2 with the dueling combine folded in (all arithmetic in f32):
    #   q_j = h_v @ wv2 + h_a @ (wa2[:, j] - mean_k wa2[:, k])
    #         + (bv2 + ba2[j] - mean(ba2))
    wv2 = params["wv2"].astype(f32)                      # (64, 1)
    wa2 = params["wa2"].astype(f32)                      # (64, A)
    bv2 = params["bv2"].astype(f32)                      # (1, 1)
    ba2 = params["ba2"].astype(f32)                      # (1, A)
    wa2_centered = wa2 - jnp.mean(wa2, axis=1, keepdims=True)

    assert action_dim <= out_cols
    wh2 = jnp.zeros((128, out_cols), f32)
    wh2 = wh2.at[0:64, 0:action_dim].set(jnp.broadcast_to(wv2, (64, action_dim)))
    wh2 = wh2.at[64:128, 0:action_dim].set(wa2_centered)
    wh2 = wh2.astype(bf16)

    bh2 = jnp.zeros((1, out_cols), f32)
    bh2 = bh2.at[:, 0:action_dim].set(bv2 + ba2 - jnp.mean(ba2))

    return w1, b1, w2, b2, wh1, bh1, wh2, bh2


def dueling_dqn_forward(x, params, *, target_tile_b=1024):
    """x: (B, state_dim) float32.  params: dict of (in,out) weights, (1,out) biases."""
    B, state_dim = x.shape
    action_dim = params["wa2"].shape[1]

    # Narrow output slab: q-values in columns 0..A-1, zero padding to a
    # sublane-friendly small width.  Block last dim == full array dim -> legal.
    out_cols = max(8, _round_up(action_dim, 8))

    # Tile selection: ~target_tile_b rows per grid step, sublane-aligned, with
    # minimal padded rows (tile_b = round_up(cdiv(B, cdiv(B, target)), 8)).
    n_tiles = max(1, _cdiv(B, target_tile_b))
    tile_b = _round_up(_cdiv(B, n_tiles), 8)
    b_pad = n_tiles * tile_b

    x_p = x if b_pad == B else jnp.pad(x, ((0, b_pad - B), (0, 0)))

    w1, b1, w2, b2, wh1, bh1, wh2, bh2 = pack_params(params, action_dim, out_cols)
    weights = (w1, b1, w2, b2, wh1, bh1, wh2, bh2)

    def resident(arr):
        return pl.BlockSpec(arr.shape, lambda i: (0, 0))

    # VMEM budget: double-buffered x/out tiles + resident weights + headroom,
    # capped well under v7x's 64 MiB physical VMEM.
    tile_bytes = tile_b * state_dim * 4 + tile_b * out_cols * 4
    weight_bytes = sum(int(a.size) * a.dtype.itemsize for a in weights)
    vmem_limit = int(min(32 * 1024 * 1024,
                         max(8 * 1024 * 1024,
                             4 * tile_bytes + 2 * weight_bytes + (4 << 20))))

    out = pl.pallas_call(
        dueling_dqn_kernel,
        out_shape=jax.ShapeDtypeStruct((b_pad, out_cols), jnp.float32),
        grid=(n_tiles,),
        in_specs=[
            pl.BlockSpec((tile_b, state_dim), lambda i: (i, 0)),
            resident(w1), resident(b1),
            resident(w2), resident(b2),
            resident(wh1), resident(bh1),
            resident(wh2), resident(bh2),
        ],
        out_specs=pl.BlockSpec((tile_b, out_cols), lambda i: (i, 0)),
        compiler_params=pltpu.CompilerParams(
            dimension_semantics=("parallel",),
            vmem_limit_bytes=vmem_limit,
        ),
    )(x_p, *weights)

    if b_pad == B and out_cols == action_dim:
        return out
    return out[:B, :action_dim]


def init_params(key, state_dim, action_dim):
    """Deterministic synthetic init (shapes match the PyTorch module, pre-transposed)."""
    dims = {
        "w1": (state_dim, 256), "b1": (1, 256),
        "w2": (256, 128),       "b2": (1, 128),
        "wv1": (128, 64),       "bv1": (1, 64),
        "wv2": (64, 1),         "bv2": (1, 1),
        "wa1": (128, 64),       "ba1": (1, 64),
        "wa2": (64, action_dim), "ba2": (1, action_dim),
    }
    params = {}
    keys = jax.random.split(key, len(dims))
    for k, (name, shape) in zip(keys, dims.items()):
        params[name] = (0.05 * jax.random.normal(k, shape)).astype(jnp.float32)
    return params


def reference_forward(x, p):
    """Plain-JAX fp32 reference for correctness checking (matches PyTorch module)."""
    h = jnp.maximum(x @ p["w1"] + p["b1"], 0.0)
    f = jnp.maximum(h @ p["w2"] + p["b2"], 0.0)
    v = jnp.maximum(f @ p["wv1"] + p["bv1"], 0.0) @ p["wv2"] + p["bv2"]
    a = jnp.maximum(f @ p["wa1"] + p["ba1"], 0.0) @ p["wa2"] + p["ba2"]
    return v + (a - a.mean(axis=1, keepdims=True))


if __name__ == "__main__":
    key = jax.random.PRNGKey(0)
    k_x, k_x2, k_p = jax.random.split(key, 3)

    batch, state_dim, action_dim = 2, 32, 4
    params = init_params(k_p, state_dim, action_dim)

    # Small inference-style batch (grid=1, padded batch rows).
    x = jax.random.normal(k_x, (batch, state_dim), dtype=jnp.float32)
    q = dueling_dqn_forward(x, params)
    jax.block_until_ready(q)
    q_ref = reference_forward(x, params)
    assert q.shape == (batch, action_dim)
    assert jnp.allclose(q, q_ref, atol=5e-2, rtol=5e-2), float(jnp.max(jnp.abs(q - q_ref)))

    # Larger replay-buffer batch: exercises the multi-step batch grid + padding.
    big_b = 1000
    x2 = jax.random.normal(k_x2, (big_b, state_dim), dtype=jnp.float32)
    q2 = dueling_dqn_forward(x2, params, target_tile_b=512)  # 2 grid steps of 504 rows
    jax.block_until_ready(q2)
    q2_ref = reference_forward(x2, params)
    assert q2.shape == (big_b, action_dim)
    assert jnp.allclose(q2, q2_ref, atol=5e-2, rtol=5e-2), float(jnp.max(jnp.abs(q2 - q2_ref)))

    print("KERNEL_OK")
</pallas_src>

<mosaic_0001>
module attributes {stable_mosaic.version = 11 : i64} {
  func.func @dueling_dqn_kernel(%arg0: i32, %arg1: memref<8x32xf32, #tpu.memory_space<vmem>>, %arg2: memref<32x256xbf16, #tpu.memory_space<vmem>>, %arg3: memref<1x256xf32, #tpu.memory_space<vmem>>, %arg4: memref<256x128xbf16, #tpu.memory_space<vmem>>, %arg5: memref<1x128xf32, #tpu.memory_space<vmem>>, %arg6: memref<128x128xbf16, #tpu.memory_space<vmem>>, %arg7: memref<1x128xf32, #tpu.memory_space<vmem>>, %arg8: memref<128x8xbf16, #tpu.memory_space<vmem>>, %arg9: memref<1x8xf32, #tpu.memory_space<vmem>>, %arg10: memref<8x8xf32, #tpu.memory_space<vmem>>) attributes {dimension_semantics = [#tpu.dimension_semantics<parallel>], iteration_bounds = array<i64: 1>, scalar_prefetch = 0 : i64, scratch_operands = 0 : i64, tpu.core_type = #tpu.core_type<tc>, window_params = [{transform_indices = @transform_0, window_bounds = array<i64: 8, 32>}, {pipeline_mode = #tpu.pipeline_mode<synchronous>, transform_indices = @transform_1, window_bounds = array<i64: 32, 256>}, {pipeline_mode = #tpu.pipeline_mode<synchronous>, transform_indices = @transform_2, window_bounds = array<i64: 1, 256>}, {pipeline_mode = #tpu.pipeline_mode<synchronous>, transform_indices = @transform_3, window_bounds = array<i64: 256, 128>}, {pipeline_mode = #tpu.pipeline_mode<synchronous>, transform_indices = @transform_4, window_bounds = array<i64: 1, 128>}, {pipeline_mode = #tpu.pipeline_mode<synchronous>, transform_indices = @transform_5, window_bounds = array<i64: 128, 128>}, {pipeline_mode = #tpu.pipeline_mode<synchronous>, transform_indices = @transform_6, window_bounds = array<i64: 1, 128>}, {pipeline_mode = #tpu.pipeline_mode<synchronous>, transform_indices = @transform_7, window_bounds = array<i64: 128, 8>}, {pipeline_mode = #tpu.pipeline_mode<synchronous>, transform_indices = @transform_8, window_bounds = array<i64: 1, 8>}, {transform_indices = @transform_9, window_bounds = array<i64: 8, 8>}]} {
    %c0 = arith.constant 0 : index
    %c0_0 = arith.constant 0 : index
    %0 = vector.load %arg1[%c0, %c0_0] : memref<8x32xf32, #tpu.memory_space<vmem>>, vector<8x32xf32>
    %1 = arith.truncf %0 : vector<8x32xf32> to vector<8x32xbf16>
    %c0_1 = arith.constant 0 : index
    %c0_2 = arith.constant 0 : index
    %2 = vector.load %arg2[%c0_1, %c0_2] : memref<32x256xbf16, #tpu.memory_space<vmem>>, vector<32x256xbf16>
    %cst = arith.constant dense<0.000000e+00> : vector<8x256xf32>
    %3 = tpu.matmul %1, %2, %cst {dimension_numbers = #tpu.dot_dimension_numbers<[1], [0], [0], [1], [0, 0, 1, 1], [], []>} : vector<8x32xbf16>, vector<32x256xbf16>, vector<8x256xf32> -> vector<8x256xf32>
    %c0_3 = arith.constant 0 : index
    %c0_4 = arith.constant 0 : index
    %4 = vector.load %arg3[%c0_3, %c0_4] : memref<1x256xf32, #tpu.memory_space<vmem>>, vector<1x256xf32>
    %5 = vector.broadcast %4 : vector<1x256xf32> to vector<8x256xf32>
    %6 = arith.addf %3, %5 : vector<8x256xf32>
    %cst_5 = arith.constant 0.000000e+00 : f32
    %7 = vector.broadcast %cst_5 : f32 to vector<8x256xf32>
    %8 = arith.maximumf %6, %7 : vector<8x256xf32>
    %9 = arith.truncf %8 : vector<8x256xf32> to vector<8x256xbf16>
    %c0_6 = arith.constant 0 : index
    %c0_7 = arith.constant 0 : index
    %10 = vector.load %arg4[%c0_6, %c0_7] : memref<256x128xbf16, #tpu.memory_space<vmem>>, vector<256x128xbf16>
    %cst_8 = arith.constant dense<0.000000e+00> : vector<8x128xf32>
    %11 = tpu.matmul %9, %10, %cst_8 {dimension_numbers = #tpu.dot_dimension_numbers<[1], [0], [0], [1], [0, 0, 1, 1], [], []>} : vector<8x256xbf16>, vector<256x128xbf16>, vector<8x128xf32> -> vector<8x128xf32>
    %c0_9 = arith.constant 0 : index
    %c0_10 = arith.constant 0 : index
    %12 = vector.load %arg5[%c0_9, %c0_10] : memref<1x128xf32, #tpu.memory_space<vmem>>, vector<1x128xf32>
    %13 = vector.broadcast %12 : vector<1x128xf32> to vector<8x128xf32>
    %14 = arith.addf %11, %13 : vector<8x128xf32>
    %cst_11 = arith.constant 0.000000e+00 : f32
    %15 = vector.broadcast %cst_11 : f32 to vector<8x128xf32>
    %16 = arith.maximumf %14, %15 : vector<8x128xf32>
    %17 = arith.truncf %16 : vector<8x128xf32> to vector<8x128xbf16>
    %c0_12 = arith.constant 0 : index
    %c0_13 = arith.constant 0 : index
    %18 = vector.load %arg6[%c0_12, %c0_13] : memref<128x128xbf16, #tpu.memory_space<vmem>>, vector<128x128xbf16>
    %cst_14 = arith.constant dense<0.000000e+00> : vector<8x128xf32>
    %19 = tpu.matmul %17, %18, %cst_14 {dimension_numbers = #tpu.dot_dimension_numbers<[1], [0], [0], [1], [0, 0, 1, 1], [], []>} : vector<8x128xbf16>, vector<128x128xbf16>, vector<8x128xf32> -> vector<8x128xf32>
    %c0_15 = arith.constant 0 : index
    %c0_16 = arith.constant 0 : index
    %20 = vector.load %arg7[%c0_15, %c0_16] : memref<1x128xf32, #tpu.memory_space<vmem>>, vector<1x128xf32>
    %21 = vector.broadcast %20 : vector<1x128xf32> to vector<8x128xf32>
    %22 = arith.addf %19, %21 : vector<8x128xf32>
    %cst_17 = arith.constant 0.000000e+00 : f32
    %23 = vector.broadcast %cst_17 : f32 to vector<8x128xf32>
    %24 = arith.maximumf %22, %23 : vector<8x128xf32>
    %25 = arith.truncf %24 : vector<8x128xf32> to vector<8x128xbf16>
    %c0_18 = arith.constant 0 : index
    %c0_19 = arith.constant 0 : index
    %26 = vector.load %arg8[%c0_18, %c0_19] : memref<128x8xbf16, #tpu.memory_space<vmem>>, vector<128x8xbf16>
    %cst_20 = arith.constant dense<0.000000e+00> : vector<8x8xf32>
    %27 = tpu.matmul %25, %26, %cst_20 {dimension_numbers = #tpu.dot_dimension_numbers<[1], [0], [0], [1], [0, 0, 1, 1], [], []>} : vector<8x128xbf16>, vector<128x8xbf16>, vector<8x8xf32> -> vector<8x8xf32>
    %c0_21 = arith.constant 0 : index
    %c0_22 = arith.constant 0 : index
    %28 = vector.load %arg9[%c0_21, %c0_22] : memref<1x8xf32, #tpu.memory_space<vmem>>, vector<1x8xf32>
    %29 = vector.broadcast %28 : vector<1x8xf32> to vector<8x8xf32>
    %30 = arith.addf %27, %29 : vector<8x8xf32>
    %c0_23 = arith.constant 0 : index
    %c0_24 = arith.constant 0 : index
    %31 = vector.load %arg10[%c0_23, %c0_24] : memref<8x8xf32, #tpu.memory_space<vmem>>, vector<8x8xf32>
    tpu.vector_store %arg10[%c0_23, %c0_24], %30 {strides = array<i32>} : memref<8x8xf32, #tpu.memory_space<vmem>>, vector<8x8xf32>,
    return
  }
  func.func @transform_0(%arg0: i32) -> (i32, i32) {
    %c0_i32 = arith.constant 0 : i32
    %c0_i32_0 = arith.constant 0 : i32
    return %arg0, %c0_i32 : i32, i32
  }
  func.func @transform_1(%arg0: i32) -> (i32, i32) {
    %c0_i32 = arith.constant 0 : i32
    %c0_i32_0 = arith.constant 0 : i32
    %c0_i32_1 = arith.constant 0 : i32
    return %c0_i32, %c0_i32_0 : i32, i32
  }
  func.func @transform_2(%arg0: i32) -> (i32, i32) {
    %c0_i32 = arith.constant 0 : i32
    %c0_i32_0 = arith.constant 0 : i32
    %c0_i32_1 = arith.constant 0 : i32
    return %c0_i32, %c0_i32_0 : i32, i32
  }
  func.func @transform_3(%arg0: i32) -> (i32, i32) {
    %c0_i32 = arith.constant 0 : i32
    %c0_i32_0 = arith.constant 0 : i32
    %c0_i32_1 = arith.constant 0 : i32
    return %c0_i32, %c0_i32_0 : i32, i32
  }
  func.func @transform_4(%arg0: i32) -> (i32, i32) {
    %c0_i32 = arith.constant 0 : i32
    %c0_i32_0 = arith.constant 0 : i32
    %c0_i32_1 = arith.constant 0 : i32
    return %c0_i32, %c0_i32_0 : i32, i32
  }
  func.func @transform_5(%arg0: i32) -> (i32, i32) {
    %c0_i32 = arith.constant 0 : i32
    %c0_i32_0 = arith.constant 0 : i32
    %c0_i32_1 = arith.constant 0 : i32
    return %c0_i32, %c0_i32_0 : i32, i32
  }
  func.func @transform_6(%arg0: i32) -> (i32, i32) {
    %c0_i32 = arith.constant 0 : i32
    %c0_i32_0 = arith.constant 0 : i32
    %c0_i32_1 = arith.constant 0 : i32
    return %c0_i32, %c0_i32_0 : i32, i32
  }
  func.func @transform_7(%arg0: i32) -> (i32, i32) {
    %c0_i32 = arith.constant 0 : i32
    %c0_i32_0 = arith.constant 0 : i32
    %c0_i32_1 = arith.constant 0 : i32
    return %c0_i32, %c0_i32_0 : i32, i32
  }
  func.func @transform_8(%arg0: i32) -> (i32, i32) {
    %c0_i32 = arith.constant 0 : i32
    %c0_i32_0 = arith.constant 0 : i32
    %c0_i32_1 = arith.constant 0 : i32
    return %c0_i32, %c0_i32_0 : i32, i32
  }
  func.func @transform_9(%arg0: i32) -> (i32, i32) {
    %c0_i32 = arith.constant 0 : i32
    %c0_i32_0 = arith.constant 0 : i32
    return %arg0, %c0_i32 : i32, i32
  }
}

</mosaic_0001>

<llo_original>
// kernel: tpu_custom_call.1
$region0: #{tpu_custom_call.1}
  #allocation0 [shape = 'u32[]', space=smem, size = 0x4, offset = 0x4, fixed_abs, tag = 'smem constant byte address 0x4 - core index']
  #allocation1 [shape = 'u32[144,128]{1,0:T(1,128)}', space=vmem, size = 0x12000, scoped, tag = 'internal scratch']
  %s0 = inlined_call_operand.vmem [shape: f32[8,32], index: 0, kind: input, shape index: {}]
  %s1 = inlined_call_operand.hbm [shape: bf16[32,256], index: 1, kind: input, shape index: {}]
  %s2 = inlined_call_operand.vmem [shape: f32[1,256], index: 2, kind: input, shape index: {}]
  %s3 = inlined_call_operand.hbm [shape: bf16[256,128], index: 3, kind: input, shape index: {}]
  %s4 = inlined_call_operand.hbm [shape: f32[1,128], index: 4, kind: input, shape index: {}]
  %s5 = inlined_call_operand.vmem [shape: bf16[128,128], index: 5, kind: input, shape index: {}]
  %s6 = inlined_call_operand.hbm [shape: f32[1,128], index: 6, kind: input, shape index: {}]
  %s7 = inlined_call_operand.vmem [shape: bf16[128,8], index: 7, kind: input, shape index: {}]
  %s8 = inlined_call_operand.vmem [shape: f32[1,8], index: 8, kind: input, shape index: {}]
  %s9 = inlined_call_operand.hbm [shape: f32[8,8], index: 9, kind: output, shape index: {}]
  %s10 = sld [smem:[#allocation0]]
  $region62: #{tpu_custom_call.1} parent=0
    _
  %s12 = ssub.s32 1, %s10
  %s13 = scalar_select 0, %s12, %s10
  $region1: #{tpu_custom_call.1} parent=0
    #allocation2 [shape = 'u8[16384]{0}', space=vmem, size = 0x4000, scoped, tag = 'input window, operand 1, single buffered']
    #allocation3 [shape = 's32[1]{0}', space=sflag, size = 0x4, scoped, tag = 'scoped memory for tpu_custom_call.1']
    #allocation4 [shape = 's32[1]{0}', space=sflag, size = 0x4, scoped, tag = 'scoped memory for tpu_custom_call.1']
    #allocation5 [shape = 'u8[65536]{0}', space=vmem, size = 0x10000, scoped, tag = 'input window, operand 3, single buffered']
    #allocation6 [shape = 's32[1]{0}', space=sflag, size = 0x4, scoped, tag = 'scoped memory for tpu_custom_call.1']
    #allocation7 [shape = 'u8[512]{0}', space=vmem, size = 0x400, scoped, tag = 'input window, operand 4, single buffered']
    #allocation8 [shape = 'u8[512]{0}', space=vmem, size = 0x400, scoped, tag = 'input window, operand 6, single buffered']
    #allocation9 [shape = 's32[1]{0}', space=sflag, size = 0x4, scoped, tag = 'scoped memory for tpu_custom_call.1']
    #allocation10 [shape = 'u8[4096]{0}', space=vmem, size = 0x1000, scoped, tag = 'output window, operand 0, single buffered']
    %14 = vsyncpa [#allocation3], 0
    %15 = vsyncpa [#allocation6], 0
    %16 = vsyncpa [#allocation9], 0
    %17 = vsyncpa [#allocation4], 0
    // Predicated region
    $region2: #{tpu_custom_call.1} parent=1 // pred_check
      _
    $region3: #{tpu_custom_call.1} parent=1 // pred_check_branch
      %19 = sbr.rel (0) target = $region5
    $region4: #{tpu_custom_call.1} parent=1 // pred_region
      _
    $region5: #{tpu_custom_call.1} parent=1 // pred_fallthru
      _
    // Predicated region
    $region6: #{tpu_custom_call.1} parent=1 // pred_check
      _
    $region7: #{tpu_custom_call.1} parent=1 // pred_check_branch
      %21 = sbr.rel (0) target = $region9
    $region8: #{tpu_custom_call.1} parent=1 // pred_region
      %s23 = ssub.s32 512, 512
      %24 = vsyncadd [#allocation3], %s23
      %s25 = sshll.u32 [#allocation2], 4
      %s26 = int_to_ptr.vmem [resolvable:$true] %s25
      %31 = dma.hbm_to_vmem [thread:$0]  %s1, 512, %s26, [#allocation3], 128, 128, 8
    $region9: #{tpu_custom_call.1} parent=1 // pred_fallthru
      _
    // Predicated region
    $region10: #{tpu_custom_call.1} parent=1 // pred_check
      _
    $region11: #{tpu_custom_call.1} parent=1 // pred_check_branch
      %33 = sbr.rel (0) target = $region13
    $region12: #{tpu_custom_call.1} parent=1 // pred_region
      _
    $region13: #{tpu_custom_call.1} parent=1 // pred_fallthru
      _
    // Predicated region
    $region14: #{tpu_custom_call.1} parent=1 // pred_check
      _
    $region15: #{tpu_custom_call.1} parent=1 // pred_check_branch
      %35 = sbr.rel (0) target = $region17
    $region16: #{tpu_custom_call.1} parent=1 // pred_region
      %s37 = ssub.s32 2048, 2048
      %38 = vsyncadd [#allocation6], %s37
      %s39 = sshll.u32 [#allocation5], 4
      %s40 = int_to_ptr.vmem [resolvable:$true] %s39
      %45 = dma.hbm_to_vmem [thread:$0]  %s3, 2048, %s40, [#allocation6], 64, 64, 4
    $region17: #{tpu_custom_call.1} parent=1 // pred_fallthru
      _
    // Predicated region
    $region18: #{tpu_custom_call.1} parent=1 // pred_check
      _
    $region19: #{tpu_custom_call.1} parent=1 // pred_check_branch
      %47 = sbr.rel (0) target = $region21
    $region20: #{tpu_custom_call.1} parent=1 // pred_region
      %s49 = ssub.s32 16, 16
      %50 = vsyncadd [#allocation6], %s49
      %s52 = sshll.u32 [#allocation7], 4
      %s53 = int_to_ptr.vmem [resolvable:$true] %s52
      %55 = dma.hbm_to_vmem [thread:$0]  %s4, 16, %s53, [#allocation6]
    $region21: #{tpu_custom_call.1} parent=1 // pred_fallthru
      _
    // Predicated region
    $region22: #{tpu_custom_call.1} parent=1 // pred_check
      _
    $region23: #{tpu_custom_call.1} parent=1 // pred_check_branch
      %57 = sbr.rel (0) target = $region25
    $region24: #{tpu_custom_call.1} parent=1 // pred_region
      _
    $region25: #{tpu_custom_call.1} parent=1 // pred_fallthru
      _
    // Predicated region
    $region26: #{tpu_custom_call.1} parent=1 // pred_check
      _
    $region27: #{tpu_custom_call.1} parent=1 // pred_check_branch
      %59 = sbr.rel (0) target = $region29
    $region28: #{tpu_custom_call.1} parent=1 // pred_region
      %s61 = ssub.s32 16, 16
      %62 = vsyncadd [#allocation9], %s61
      %s64 = sshll.u32 [#allocation8], 4
      %s65 = int_to_ptr.vmem [resolvable:$true] %s64
      %67 = dma.hbm_to_vmem [thread:$0]  %s6, 16, %s65, [#allocation9]
    $region29: #{tpu_custom_call.1} parent=1 // pred_fallthru
      _
    // Predicated region
    $region30: #{tpu_custom_call.1} parent=1 // pred_check
      _
    $region31: #{tpu_custom_call.1} parent=1 // pred_check_branch
      %69 = sbr.rel (0) target = $region33
    $region32: #{tpu_custom_call.1} parent=1 // pred_region
      _
    $region33: #{tpu_custom_call.1} parent=1 // pred_fallthru
      _
    // Predicated region
    $region34: #{tpu_custom_call.1} parent=1 // pred_check
      _
    $region35: #{tpu_custom_call.1} parent=1 // pred_check_branch
      %71 = sbr.rel (0) target = $region37
    $region36: #{tpu_custom_call.1} parent=1 // pred_region
      _
    $region37: #{tpu_custom_call.1} parent=1 // pred_fallthru
      _
    // Predicated region
    $region38: #{tpu_custom_call.1} parent=1 // pred_check
      _
    $region39: #{tpu_custom_call.1} parent=1 // pred_check_branch
      %73 = sbr.rel (0) target = $region41
    $region40: #{tpu_custom_call.1} parent=1 // pred_region
      %74 = dma.done [#allocation3], 512
    $region41: #{tpu_custom_call.1} parent=1 // pred_fallthru
      _
    // Predicated region
    $region42: #{tpu_custom_call.1} parent=1 // pred_check
      _
    $region43: #{tpu_custom_call.1} parent=1 // pred_check_branch
      %76 = sbr.rel (0) target = $region45
    $region44: #{tpu_custom_call.1} parent=1 // pred_region
      %77 = dma.done [#allocation6], 2048
    $region45: #{tpu_custom_call.1} parent=1 // pred_fallthru
      _
    // Predicated region
    $region46: #{tpu_custom_call.1} parent=1 // pred_check
      _
    $region47: #{tpu_custom_call.1} parent=1 // pred_check_branch
      %79 = sbr.rel (0) target = $region49
    $region48: #{tpu_custom_call.1} parent=1 // pred_region
      %80 = dma.done [#allocation6], 16
    $region49: #{tpu_custom_call.1} parent=1 // pred_fallthru
      _
    // Predicated region
    $region50: #{tpu_custom_call.1} parent=1 // pred_check
      _
    $region51: #{tpu_custom_call.1} parent=1 // pred_check_branch
      %82 = sbr.rel (0) target = $region53
    $region52: #{tpu_custom_call.1} parent=1 // pred_region
      %83 = dma.done [#allocation9], 16
    $region53: #{tpu_custom_call.1} parent=1 // pred_fallthru
      _
    %v85 = vld [vmem:[%s0] sm:$0xff]
    %v86 = vpack.c.bf16 %v85, %v85
    %v87 = vld [vmem:[#allocation2] sm:$0xff]
    %v88 = vld [vmem:[#allocation2 + $0x8] sm:$0xff]
    %v89 = vld [vmem:[#allocation2 + $0x10] sm:$0xff]
    %v90 = vld [vmem:[#allocation2 + $0x18] sm:$0xff]
    %v91 = vld [vmem:[%s2] sm:$0x3]
    %v93 = vlaneseq
    %v94 = vshrl.u32 %v93, 7
    %v95 = vsub.s32 0, %v94
    %v96 = vrot.slane %v91, %v95
    %v97 = vlaneseq
    %v98 = vshrl.u32 %v97, 7
    %v99 = vsub.s32 1, %v98
    %v100 = vrot.slane %v91, %v99
    %v107 = vunpack.c.l.b16 %v87
    %v108 = vunpack.c.h.b16 %v87
    %v109 = vunpack.c.l.b16 %v88
    %v110 = vunpack.c.h.b16 %v88
    %v111 = vunpack.c.l.b16 %v89
    %v112 = vunpack.c.h.b16 %v89
    %v113 = vunpack.c.l.b16 %v90
    %v114 = vunpack.c.h.b16 %v90
    %v115 = vpack.c.b16 %v109, %v107
    %v116 = vpack.c.b16 %v110, %v108
    %v117 = vpack.c.b16 %v113, %v111
    %v118 = vpack.c.b16 %v114, %v112
    %vm123 = vcmask 261120
    %v125 = vsel %vm123, %v86, 0
    %127 = vmatprep.subr.bf16.mxu0 0
    %128 = vmatpush1.bf16.msra.mxu0 0
    %129 = vmatprep.subr.bf16.mxu0 0
    %130 = vmatpush1.bf16.msra.mxu0 0
    %131 = vmatprep.subr.bf16.mxu0 0
    %132 = vmatpush1.bf16.msra.mxu0 0
    %133 = vmatprep.subr.bf16.mxu0 0
    %134 = vmatpush1.bf16.msra.mxu0 0
    %135 = vmatprep.subr.bf16.mxu0 0
    %136 = vmatpush1.bf16.msra.mxu0 0
    %137 = vmatprep.subr.bf16.mxu0 0
    %138 = vmatpush1.bf16.msra.mxu0 0
    %139 = vmatprep.subr.bf16.mxu0 %v118
    %140 = vmatpush1.bf16.msra.mxu0 %v117
    %141 = vmatprep.subr.bf16.mxu0 %v116
    %142 = vmatpush1.bf16.msra.mxu0 %v115
    %143 = vmatprep.subr.bf16.mxu0 0
    %144 = vmatpush2.bf16.msra.mxu0 0
    %145 = vmatprep.subr.bf16.mxu0 0
    %146 = vmatpush2.bf16.msra.mxu0 0
    %147 = vmatprep.subr.bf16.mxu0 0
    %148 = vmatpush2.bf16.msra.mxu0 0
    %149 = vmatprep.subr.bf16.mxu0 0
    %150 = vmatpush2.bf16.msra.mxu0 0
    %151 = vmatprep.subr.bf16.mxu0 0
    %152 = vmatpush2.bf16.msra.mxu0 0
    %153 = vmatprep.subr.bf16.mxu0 0
    %154 = vmatpush2.bf16.msra.mxu0 0
    %155 = vmatprep.subr.bf16.mxu0 0
    %156 = vmatpush2.bf16.msra.mxu0 0
    %157 = vmatprep.subr.bf16.mxu0 0
    %158 = vmatpush2.bf16.msra.mxu0 0
    %159 = vmatprep.mubr.bf16.mxu0 0
    %160 = vmatmul.mubr.bf16.gmra.mxu0 %v125
    %v161 = vpop.f32.mrf.mxu0
    %v162 = vadd.f32 %v96, %v161
    %v163 = vpop.f32.mrf.mxu0
    %v164 = vadd.f32 %v100, %v163
    %v165 = vpop.f32.mrf.mxu0
    %v166 = vpop.f32.mrf.mxu0
    %167 = vdwg.mxu0
    %v168 = vmax.f32 %v162, 0.0
    %v169 = vmax.f32 %v164, 0.0
    %v170 = vpack.c.bf16 %v168, %v168
    %v171 = vpack.c.bf16 %v169, %v169
    %v172 = vld [vmem:[#allocation5] sm:$0xf]
    %v173 = vld [vmem:[#allocation5 + $0x4] sm:$0xf]
    %v174 = vld [vmem:[#allocation5 + $0x8] sm:$0xf]
    %v175 = vld [vmem:[#allocation5 + $0xc] sm:$0xf]
    %v176 = vld [vmem:[#allocation5 + $0x10] sm:$0xf]
    %v177 = vld [vmem:[#allocation5 + $0x14] sm:$0xf]
    %v178 = vld [vmem:[#allocation5 + $0x18] sm:$0xf]
    %v179 = vld [vmem:[#allocation5 + $0x1c] sm:$0xf]
    %v180 = vld [vmem:[#allocation5 + $0x20] sm:$0xf]
    %v181 = vld [vmem:[#allocation5 + $0x24] sm:$0xf]
    %v182 = vld [vmem:[#allocation5 + $0x28] sm:$0xf]
    %v183 = vld [vmem:[#allocation5 + $0x2c] sm:$0xf]
    %v184 = vld [vmem:[#allocation5 + $0x30] sm:$0xf]
    %v185 = vld [vmem:[#allocation5 + $0x34] sm:$0xf]
    %v186 = vld [vmem:[#allocation5 + $0x38] sm:$0xf]
    %v187 = vld [vmem:[#allocation5 + $0x3c] sm:$0xf]
    %v188 = vld [vmem:[#allocation5 + $0x40] sm:$0xf]
    %v189 = vld [vmem:[#allocation5 + $0x44] sm:$0xf]
    %v190 = vld [vmem:[#allocation5 + $0x48] sm:$0xf]
    %v191 = vld [vmem:[#allocation5 + $0x4c] sm:$0xf]
    %v192 = vld [vmem:[#allocation5 + $0x50] sm:$0xf]
    %v193 = vld [vmem:[#allocation5 + $0x54] sm:$0xf]
    %v194 = vld [vmem:[#allocation5 + $0x58] sm:$0xf]
    %v195 = vld [vmem:[#allocation5 + $0x5c] sm:$0xf]
    %v196 = vld [vmem:[#allocation5 + $0x60] sm:$0xf]
    %v197 = vld [vmem:[#allocation5 + $0x64] sm:$0xf]
    %v198 = vld [vmem:[#allocation5 + $0x68] sm:$0xf]
    %v199 = vld [vmem:[#allocation5 + $0x6c] sm:$0xf]
    %v200 = vld [vmem:[#allocation5 + $0x70] sm:$0xf]
    %v201 = vld [vmem:[#allocation5 + $0x74] sm:$0xf]
    %v202 = vld [vmem:[#allocation5 + $0x78] sm:$0xf]
    %v203 = vld [vmem:[#allocation5 + $0x7c] sm:$0xf]
    %v204 = vld [vmem:[#allocation7] sm:$0x1]
    %v206 = vlaneseq
    %v207 = vshrl.u32 %v206, 7
    %v208 = vsub.s32 0, %v207
    %v209 = vrot.slane %v204, %v208
    %v243 = vunpack.c.l.b16 %v172
    %v244 = vunpack.c.l.b16 %v173
    %v245 = vunpack.c.l.b16 %v174
    %v246 = vunpack.c.l.b16 %v175
    %v247 = vunpack.c.l.b16 %v176
    %v248 = vunpack.c.l.b16 %v177
    %v249 = vunpack.c.l.b16 %v178
    %v250 = vunpack.c.l.b16 %v179
    %v251 = vunpack.c.l.b16 %v180
    %v252 = vunpack.c.l.b16 %v181
    %v253 = vunpack.c.l.b16 %v182
    %v254 = vunpack.c.l.b16 %v183
    %v255 = vunpack.c.l.b16 %v184
    %v256 = vunpack.c.l.b16 %v185
    %v257 = vunpack.c.l.b16 %v186
    %v258 = vunpack.c.l.b16 %v187
    %v259 = vunpack.c.l.b16 %v188
    %v260 = vunpack.c.l.b16 %v189
    %v261 = vunpack.c.l.b16 %v190
    %v262 = vunpack.c.l.b16 %v191
    %v263 = vunpack.c.l.b16 %v192
    %v264 = vunpack.c.l.b16 %v193
    %v265 = vunpack.c.l.b16 %v194
    %v266 = vunpack.c.l.b16 %v195
    %v267 = vunpack.c.l.b16 %v196
    %v268 = vunpack.c.l.b16 %v197
    %v269 = vunpack.c.l.b16 %v198
    %v270 = vunpack.c.l.b16 %v199
    %v271 = vunpack.c.l.b16 %v200
    %v272 = vunpack.c.l.b16 %v201
    %v273 = vunpack.c.l.b16 %v202
    %v274 = vunpack.c.l.b16 %v203
    %v275 = vpack.c.b16 %v244, %v243
    %v276 = vpack.c.b16 %v246, %v245
    %v277 = vpack.c.b16 %v248, %v247
    %v278 = vpack.c.b16 %v250, %v249
    %v279 = vpack.c.b16 %v252, %v251
    %v280 = vpack.c.b16 %v254, %v253
    %v281 = vpack.c.b16 %v256, %v255
    %v282 = vpack.c.b16 %v258, %v257
    %v283 = vpack.c.b16 %v260, %v259
    %v284 = vpack.c.b16 %v262, %v261
    %v285 = vpack.c.b16 %v264, %v263
    %v286 = vpack.c.b16 %v266, %v265
    %v287 = vpack.c.b16 %v268, %v267
    %v288 = vpack.c.b16 %v270, %v269
    %v289 = vpack.c.b16 %v272, %v271
    %v290 = vpack.c.b16 %v274, %v273
    %307 = vmatprep.subr.bf16.mxu0 0
    %308 = vmatpush1.bf16.msra.mxu0 %v282
    %309 = vmatprep.subr.bf16.mxu0 0
    %310 = vmatpush1.bf16.msra.mxu0 %v281
    %311 = vmatprep.subr.bf16.mxu0 0
    %312 = vmatpush1.bf16.msra.mxu0 %v280
    %313 = vmatprep.subr.bf16.mxu0 0
    %314 = vmatpush1.bf16.msra.mxu0 %v279
    %315 = vmatprep.subr.bf16.mxu0 0
    %316 = vmatpush1.bf16.msra.mxu0 %v278
    %317 = vmatprep.subr.bf16.mxu0 0
    %318 = vmatpush1.bf16.msra.mxu0 %v277
    %319 = vmatprep.subr.bf16.mxu0 0
    %320 = vmatpush1.bf16.msra.mxu0 %v276
    %321 = vmatprep.subr.bf16.mxu0 0
    %322 = vmatpush1.bf16.msra.mxu0 %v275
    %323 = vmatprep.subr.bf16.mxu0 0
    %324 = vmatpush2.bf16.msra.mxu0 %v290
    %325 = vmatprep.subr.bf16.mxu0 0
    %326 = vmatpush2.bf16.msra.mxu0 %v289
    %327 = vmatprep.subr.bf16.mxu0 0
    %328 = vmatpush2.bf16.msra.mxu0 %v288
    %329 = vmatprep.subr.bf16.mxu0 0
    %330 = vmatpush2.bf16.msra.mxu0 %v287
    %331 = vmatprep.subr.bf16.mxu0 0
    %332 = vmatpush2.bf16.msra.mxu0 %v286
    %333 = vmatprep.subr.bf16.mxu0 0
    %334 = vmatpush2.bf16.msra.mxu0 %v285
    %335 = vmatprep.subr.bf16.mxu0 0
    %336 = vmatpush2.bf16.msra.mxu0 %v284
    %337 = vmatprep.subr.bf16.mxu0 0
    %338 = vmatpush2.bf16.msra.mxu0 %v283
    %339 = vmatprep.mubr.bf16.mxu0 %v171
    %340 = vmatmul.mubr.bf16.gmra.mxu0 %v170
    %v341 = vpop.f32.mrf.mxu0
    %v342 = vadd.f32 %v209, %v341
    %v343 = vpop.f32.mrf.mxu0
    %v344 = vpop.f32.mrf.mxu0
    %v345 = vpop.f32.mrf.mxu0
    %346 = vdwg.mxu0
    %v347 = vmax.f32 %v342, 0.0
    %v348 = vpack.c.bf16 %v347, %v347
    %v349 = vld [vmem:[%s5] sm:$0xf]
    %v350 = vld [vmem:[%s5 + $0x4] sm:$0xf]
    %v351 = vld [vmem:[%s5 + $0x8] sm:$0xf]
    %v352 = vld [vmem:[%s5 + $0xc] sm:$0xf]
    %v353 = vld [vmem:[%s5 + $0x10] sm:$0xf]
    %v354 = vld [vmem:[%s5 + $0x14] sm:$0xf]
    %v355 = vld [vmem:[%s5 + $0x18] sm:$0xf]
    %v356 = vld [vmem:[%s5 + $0x1c] sm:$0xf]
    %v357 = vld [vmem:[%s5 + $0x20] sm:$0xf]
    %v358 = vld [vmem:[%s5 + $0x24] sm:$0xf]
    %v359 = vld [vmem:[%s5 + $0x28] sm:$0xf]
    %v360 = vld [vmem:[%s5 + $0x2c] sm:$0xf]
    %v361 = vld [vmem:[%s5 + $0x30] sm:$0xf]
    %v362 = vld [vmem:[%s5 + $0x34] sm:$0xf]
    %v363 = vld [vmem:[%s5 + $0x38] sm:$0xf]
    %v364 = vld [vmem:[%s5 + $0x3c] sm:$0xf]
    %v365 = vld [vmem:[#allocation8] sm:$0x1]
    %v367 = vlaneseq
    %v368 = vshrl.u32 %v367, 7
    %v369 = vsub.s32 0, %v368
    %v370 = vrot.slane %v365, %v369
    %v388 = vunpack.c.l.b16 %v349
    %v389 = vunpack.c.l.b16 %v350
    %v390 = vunpack.c.l.b16 %v351
    %v391 = vunpack.c.l.b16 %v352
    %v392 = vunpack.c.l.b16 %v353
    %v393 = vunpack.c.l.b16 %v354
    %v394 = vunpack.c.l.b16 %v355
    %v395 = vunpack.c.l.b16 %v356
    %v396 = vunpack.c.l.b16 %v357
    %v397 = vunpack.c.l.b16 %v358
    %v398 = vunpack.c.l.b16 %v359
    %v399 = vunpack.c.l.b16 %v360
    %v400 = vunpack.c.l.b16 %v361
    %v401 = vunpack.c.l.b16 %v362
    %v402 = vunpack.c.l.b16 %v363
    %v403 = vunpack.c.l.b16 %v364
    %v404 = vpack.c.b16 %v389, %v388
    %v405 = vpack.c.b16 %v391, %v390
    %v406 = vpack.c.b16 %v393, %v392
    %v407 = vpack.c.b16 %v395, %v394
    %v408 = vpack.c.b16 %v397, %v396
    %v409 = vpack.c.b16 %v399, %v398
    %v410 = vpack.c.b16 %v401, %v400
    %v411 = vpack.c.b16 %v403, %v402
    %420 = vmatprep.subr.bf16.mxu0 0
    %421 = vmatpush1.bf16.msra.mxu0 %v411
    %422 = vmatprep.subr.bf16.mxu0 0
    %423 = vmatpush1.bf16.msra.mxu0 %v410
    %424 = vmatprep.subr.bf16.mxu0 0
    %425 = vmatpush1.bf16.msra.mxu0 %v409
    %426 = vmatprep.subr.bf16.mxu0 0
    %427 = vmatpush1.bf16.msra.mxu0 %v408
    %428 = vmatprep.subr.bf16.mxu0 0
    %429 = vmatpush1.bf16.msra.mxu0 %v407
    %430 = vmatprep.subr.bf16.mxu0 0
    %431 = vmatpush1.bf16.msra.mxu0 %v406
    %432 = vmatprep.subr.bf16.mxu0 0
    %433 = vmatpush1.bf16.msra.mxu0 %v405
    %434 = vmatprep.subr.bf16.mxu0 0
    %435 = vmatpush1.bf16.msra.mxu0 %v404
    %436 = vmatprep.subr.bf16.mxu0 0
    %437 = vmatpush2.bf16.msra.mxu0 0
    %438 = vmatprep.subr.bf16.mxu0 0
    %439 = vmatpush2.bf16.msra.mxu0 0
    %440 = vmatprep.subr.bf16.mxu0 0
    %441 = vmatpush2.bf16.msra.mxu0 0
    %442 = vmatprep.subr.bf16.mxu0 0
    %443 = vmatpush2.bf16.msra.mxu0 0
    %444 = vmatprep.subr.bf16.mxu0 0
    %445 = vmatpush2.bf16.msra.mxu0 0
    %446 = vmatprep.subr.bf16.mxu0 0
    %447 = vmatpush2.bf16.msra.mxu0 0
    %448 = vmatprep.subr.bf16.mxu0 0
    %449 = vmatpush2.bf16.msra.mxu0 0
    %450 = vmatprep.subr.bf16.mxu0 0
    %451 = vmatpush2.bf16.msra.mxu0 0
    %452 = vmatprep.mubr.bf16.mxu0 0
    %453 = vmatmul.mubr.bf16.gmra.mxu0 %v348
    %v454 = vpop.f32.mrf.mxu0
    %v455 = vadd.f32 %v370, %v454
    %v456 = vpop.f32.mrf.mxu0
    %v457 = vpop.f32.mrf.mxu0
    %v458 = vpop.f32.mrf.mxu0
    %459 = vdwg.mxu0
    %v460 = vmax.f32 %v455, 0.0
    %v461 = vpack.c.bf16 %v460, %v460
    %v462 = vld [vmem:[%s7] sm:$0xf]
    %v463 = vld [vmem:[%s7 + $0x4] sm:$0xf]
    %v464 = vld [vmem:[%s7 + $0x8] sm:$0xf]
    %v465 = vld [vmem:[%s7 + $0xc] sm:$0xf]
    %v466 = vld [vmem:[%s7 + $0x10] sm:$0xf]
    %v467 = vld [vmem:[%s7 + $0x14] sm:$0xf]
    %v468 = vld [vmem:[%s7 + $0x18] sm:$0xf]
    %v469 = vld [vmem:[%s7 + $0x1c] sm:$0xf]
    %v470 = vld [vmem:[%s7 + $0x20] sm:$0xf]
    %v471 = vld [vmem:[%s7 + $0x24] sm:$0xf]
    %v472 = vld [vmem:[%s7 + $0x28] sm:$0xf]
    %v473 = vld [vmem:[%s7 + $0x2c] sm:$0xf]
    %v474 = vld [vmem:[%s7 + $0x30] sm:$0xf]
    %v475 = vld [vmem:[%s7 + $0x34] sm:$0xf]
    %v476 = vld [vmem:[%s7 + $0x38] sm:$0xf]
    %v477 = vld [vmem:[%s7 + $0x3c] sm:$0xf]
    %v478 = vld [vmem:[%s8] sm:$0x1]
    %v480 = vlaneseq
    %v481 = vshrl.u32 %v480, 7
    %v482 = vsub.s32 0, %v481
    %v483 = vrot.slane %v478, %v482
    %v501 = vunpack.c.l.b16 %v462
    %v502 = vunpack.c.l.b16 %v463
    %v503 = vunpack.c.l.b16 %v464
    %v504 = vunpack.c.l.b16 %v465
    %v505 = vunpack.c.l.b16 %v466
    %v506 = vunpack.c.l.b16 %v467
    %v507 = vunpack.c.l.b16 %v468
    %v508 = vunpack.c.l.b16 %v469
    %v509 = vunpack.c.l.b16 %v470
    %v510 = vunpack.c.l.b16 %v471
    %v511 = vunpack.c.l.b16 %v472
    %v512 = vunpack.c.l.b16 %v473
    %v513 = vunpack.c.l.b16 %v474
    %v514 = vunpack.c.l.b16 %v475
    %v515 = vunpack.c.l.b16 %v476
    %v516 = vunpack.c.l.b16 %v477
    %v517 = vpack.c.b16 %v502, %v501
    %v518 = vpack.c.b16 %v504, %v503
    %v519 = vpack.c.b16 %v506, %v505
    %v520 = vpack.c.b16 %v508, %v507
    %v521 = vpack.c.b16 %v510, %v509
    %v522 = vpack.c.b16 %v512, %v511
    %v523 = vpack.c.b16 %v514, %v513
    %v524 = vpack.c.b16 %v516, %v515
    %533 = vmatprep.subr.bf16.mxu0 0
    %534 = vmatpush1.bf16.msra.mxu0 %v524
    %535 = vmatprep.subr.bf16.mxu0 0
    %536 = vmatpush1.bf16.msra.mxu0 %v523
    %537 = vmatprep.subr.bf16.mxu0 0
    %538 = vmatpush1.bf16.msra.mxu0 %v522
    %539 = vmatprep.subr.bf16.mxu0 0
    %540 = vmatpush1.bf16.msra.mxu0 %v521
    %541 = vmatprep.subr.bf16.mxu0 0
    %542 = vmatpush1.bf16.msra.mxu0 %v520
    %543 = vmatprep.subr.bf16.mxu0 0
    %544 = vmatpush1.bf16.msra.mxu0 %v519
    %545 = vmatprep.subr.bf16.mxu0 0
    %546 = vmatpush1.bf16.msra.mxu0 %v518
    %547 = vmatprep.subr.bf16.mxu0 0
    %548 = vmatpush1.bf16.msra.mxu0 %v517
    %549 = vmatprep.subr.bf16.mxu0 0
    %550 = vmatpush2.bf16.msra.mxu0 0
    %551 = vmatprep.subr.bf16.mxu0 0
    %552 = vmatpush2.bf16.msra.mxu0 0
    %553 = vmatprep.subr.bf16.mxu0 0
    %554 = vmatpush2.bf16.msra.mxu0 0
    %555 = vmatprep.subr.bf16.mxu0 0
    %556 = vmatpush2.bf16.msra.mxu0 0
    %557 = vmatprep.subr.bf16.mxu0 0
    %558 = vmatpush2.bf16.msra.mxu0 0
    %559 = vmatprep.subr.bf16.mxu0 0
    %560 = vmatpush2.bf16.msra.mxu0 0
    %561 = vmatprep.subr.bf16.mxu0 0
    %562 = vmatpush2.bf16.msra.mxu0 0
    %563 = vmatprep.subr.bf16.mxu0 0
    %564 = vmatpush2.bf16.msra.mxu0 0
    %565 = vmatprep.mubr.bf16.mxu0 0
    %566 = vmatmul.mubr.bf16.gmra.mxu0 %v461
    %v567 = vpop.f32.mrf.mxu0
    %v568 = vadd.f32 %v483, %v567
    %v569 = vpop.f32.mrf.mxu0
    %v570 = vpop.f32.mrf.mxu0
    %v571 = vpop.f32.mrf.mxu0
    %572 = vdwg.mxu0
    %vm573 = vcmask 64512
    %574 = vst.msk [vmem:[#allocation10] sm:$0xff] %vm573, %v568
    // Predicated region
    $region54: #{tpu_custom_call.1} parent=1 // pred_check
      _
    $region55: #{tpu_custom_call.1} parent=1 // pred_check_branch
      %576 = sbr.rel (0) target = $region57
    $region56: #{tpu_custom_call.1} parent=1 // pred_region
      %s578 = ssub.s32 128, 128
      %579 = vsyncadd [#allocation4], %s578
      %s581 = sshll.u32 [#allocation10], 4
      %s582 = int_to_ptr.vmem [resolvable:$true] %s581
      %584 = dma.vmem_to_hbm [thread:$0]  %s582, 128, %s9, [#allocation4]
    $region57: #{tpu_custom_call.1} parent=1 // pred_fallthru
      _
    // Predicated region
    $region58: #{tpu_custom_call.1} parent=1 // pred_check
      _
    $region59: #{tpu_custom_call.1} parent=1 // pred_check_branch
      %586 = sbr.rel (0) target = $region61
    $region60: #{tpu_custom_call.1} parent=1 // pred_region
      %587 = dma.done [#allocation4], 128
    $region61: #{tpu_custom_call.1} parent=1 // pred_fallthru
      _
    %588 = vsyncpa [#allocation3], 1
    %589 = vsyncpa [#allocation6], 1
    %590 = vsyncpa [#allocation9], 1
    %591 = vsyncpa [#allocation4], 1

</llo_original>
